<compile_context>
chip_gen: v7x
topology: tpu7x:2x2x1
jax: 0.10.0
libtpu: 0.0.40
codegen_flags: <defaults>
</compile_context>

<pallas_src>
import functools

import jax
import jax.numpy as jnp
from jax.experimental import pallas as pl
from jax.experimental.pallas import tpu as pltpu

SLAB_LANES = 128  # lane-dense weight slab width


def _round_up(x, m):
    return ((x + m - 1) // m) * m


def char_rnn_kernel(x_ref, w_ref, out_ref, *, T, Bb, I, H, O, offs):
    """x_ref: (T, Bb, I) one batch block; w_ref: (rows, 128) packed weight slab;
    out_ref: (Bb, O) log-probs for this block."""
    r_wih, r_whh, r_b, r_wout, r_bout = offs

    # One-time static slices of the packed slab (loop-invariant, off the chain).
    w_ih = w_ref[r_wih:r_wih + I, :H]          # (I, H)
    w_hh = w_ref[r_whh:r_whh + H, :H]          # (H, H)  kept in vregs
    b = w_ref[r_b:r_b + 1, :H]                 # (1, H)  pre-summed b_ih + b_hh
    w_out = w_ref[r_wout:r_wout + H, :O]       # (H, O)
    b_out = w_ref[r_bout:r_bout + 1, :O]       # (1, O)

    # Hoisted input projection: one MXU matmul covering every timestep.
    # (T, Bb, I) -> (T*Bb, I) is a free relayout (Bb = 8-sublane tile, lanes unchanged).
    x = x_ref[...].reshape(T * Bb, I)
    x_proj = jnp.dot(x, w_ih, preferred_element_type=jnp.float32) + b   # (T*Bb, H)

    # Serial recurrence: h_t = tanh(x_proj[t] + h_{t-1} @ W_hh).
    # Static Python loop with literal 8-aligned offsets -> tile-aligned free views.
    h = jnp.zeros((Bb, H), dtype=jnp.float32)
    for t in range(T):
        x_t = x_proj[t * Bb:(t + 1) * Bb, :]                            # (Bb, H)
        h = jnp.tanh(x_t + jnp.dot(h, w_hh, preferred_element_type=jnp.float32))

    # hidden_to_output linear + LogSoftmax(dim=1).
    logits = jnp.dot(h, w_out, preferred_element_type=jnp.float32) + b_out  # (Bb, O)
    m = jnp.max(logits, axis=1, keepdims=True)
    shifted = logits - m
    lse = jnp.log(jnp.sum(jnp.exp(shifted), axis=1, keepdims=True))
    out_ref[...] = shifted - lse


def prepare_params(w_ih, w_hh, b_ih, b_hh, w_out, b_out):
    """One-time weight prep: transpose, pre-sum biases, and pack everything into
    a single lane-dense (rows, 128) f32 slab (sections at 8-aligned sublane
    offsets) so the kernel fetches all parameters with one dense DMA."""
    H, I = w_ih.shape
    O = w_out.shape[0]

    r_wih = 0
    r_whh = r_wih + _round_up(I, 8)
    r_b = r_whh + _round_up(H, 8)
    r_wout = r_b + 8
    r_bout = r_wout + _round_up(H, 8)
    rows = r_bout + 8

    slab = jnp.zeros((rows, SLAB_LANES), jnp.float32)
    slab = slab.at[r_wih:r_wih + I, :H].set(jnp.asarray(w_ih, jnp.float32).T)
    slab = slab.at[r_whh:r_whh + H, :H].set(jnp.asarray(w_hh, jnp.float32).T)
    slab = slab.at[r_b:r_b + 1, :H].set(
        (jnp.asarray(b_ih, jnp.float32) + jnp.asarray(b_hh, jnp.float32)).reshape(1, H))
    slab = slab.at[r_wout:r_wout + H, :O].set(jnp.asarray(w_out, jnp.float32).T)
    slab = slab.at[r_bout:r_bout + 1, :O].set(jnp.asarray(b_out, jnp.float32).reshape(1, O))

    return {
        "slab": slab,
        "dims": (I, H, O),
        "offsets": (r_wih, r_whh, r_b, r_wout, r_bout),
    }


def _pick_block_b(b_pad, target=512):
    """Largest multiple of 8 that divides b_pad and is <= target."""
    best = 8
    d = 8
    while d <= min(b_pad, target):
        if b_pad % d == 0:
            best = d
        d += 8
    return best


def char_rnn_forward(x, params):
    """x: (T, B, I) f32 (seq-major, like nn.RNN default); params from
    prepare_params.  Returns (B, O) log-probabilities."""
    slab = params["slab"]
    I, H, O = params["dims"]
    offs = params["offsets"]

    T, B, I_in = x.shape
    assert I_in == I, "input feature size mismatch"

    # Pad batch to a multiple of 8 sublanes (zero-fill); real rows sliced off below.
    B_pad = _round_up(max(B, 1), 8)
    x = jnp.asarray(x, jnp.float32)
    if B_pad != B:
        x = jnp.pad(x, ((0, 0), (0, B_pad - B), (0, 0)))

    # Batch-block grid: degenerates to grid=(1,) at small batches; shards across
    # both TensorCores on v7x for large batches.  Operands are tiny (<< VMEM on
    # every generation), so no further tiling is needed.
    block_b = _pick_block_b(B_pad)
    grid = (B_pad // block_b,)
    rows = slab.shape[0]

    flops = 2 * T * B_pad * H * (I + H) + 2 * B_pad * H * O
    cost = pl.CostEstimate(
        flops=flops,
        transcendentals=T * B_pad * H,
        bytes_accessed=x.size * 4 + slab.size * 4 + B_pad * O * 4,
    )

    out = pl.pallas_call(
        functools.partial(char_rnn_kernel, T=T, Bb=block_b, I=I, H=H, O=O, offs=offs),
        out_shape=jax.ShapeDtypeStruct((B_pad, O), jnp.float32),
        grid=grid,
        in_specs=[
            pl.BlockSpec((T, block_b, I), lambda i: (0, i, 0)),
            pl.BlockSpec((rows, SLAB_LANES), lambda i: (0, 0)),
        ],
        out_specs=pl.BlockSpec((block_b, O), lambda i: (i, 0)),
        compiler_params=pltpu.CompilerParams(dimension_semantics=("parallel",)),
        cost_estimate=cost,
    )(x, slab)

    return out[:B]


def char_rnn_reference(x, w_ih, w_hh, b_ih, b_hh, w_out, b_out):
    """Pure-JAX reference matching PyTorch CharRNN semantics."""
    T, B, I = x.shape
    H = w_hh.shape[0]
    h = jnp.zeros((B, H), jnp.float32)
    for t in range(T):
        h = jnp.tanh(x[t] @ w_ih.T + b_ih + h @ w_hh.T + b_hh)
    logits = h @ w_out.T + b_out
    return jax.nn.log_softmax(logits, axis=1)


if __name__ == "__main__":
    # Small shapes implied by the module: seq=8, batch=2, input=4, hidden=32, output=8
    T, B, I, H, O = 8, 2, 4, 32, 8

    key = jax.random.PRNGKey(0)
    kx, k1, k2, k3, k4, k5, k6 = jax.random.split(key, 7)

    # PyTorch-style init: uniform(-1/sqrt(H), 1/sqrt(H))
    bound = 1.0 / float(H) ** 0.5
    u = lambda k, shape: jax.random.uniform(k, shape, jnp.float32, -bound, bound)

    x = jax.random.normal(kx, (T, B, I), jnp.float32)
    w_ih = u(k1, (H, I))
    w_hh = u(k2, (H, H))
    b_ih = u(k3, (H,))
    b_hh = u(k4, (H,))
    w_out = u(k5, (O, H))
    b_out = u(k6, (O,))

    # One-time weight prep (outside the per-call forward path).
    params = prepare_params(w_ih, w_hh, b_ih, b_hh, w_out, b_out)
    params["slab"] = jax.block_until_ready(params["slab"])

    out = char_rnn_forward(x, params)
    out = jax.block_until_ready(out)

    ref = char_rnn_reference(x, w_ih, w_hh, b_ih, b_hh, w_out, b_out)
    assert out.shape == (B, O)
    assert jnp.allclose(out, ref, atol=1e-5, rtol=1e-5), "mismatch vs reference"

    print("KERNEL_OK")
</pallas_src>

<mosaic_0001>
module attributes {stable_mosaic.version = 11 : i64} {
  func.func @char_rnn_kernel(%arg0: i32, %arg1: memref<8x8x4xf32, #tpu.memory_space<vmem>>, %arg2: memref<88x128xf32, #tpu.memory_space<vmem>>, %arg3: memref<8x8xf32, #tpu.memory_space<vmem>>) attributes {dimension_semantics = [#tpu.dimension_semantics<parallel>], iteration_bounds = array<i64: 1>, scalar_prefetch = 0 : i64, scratch_operands = 0 : i64, tpu.core_type = #tpu.core_type<tc>, window_params = [{transform_indices = @transform_0, window_bounds = array<i64: 8, 8, 4>}, {pipeline_mode = #tpu.pipeline_mode<synchronous>, transform_indices = @transform_1, window_bounds = array<i64: 88, 128>}, {transform_indices = @transform_2, window_bounds = array<i64: 8, 8>}]} {
    %c0 = arith.constant 0 : index
    %c0_0 = arith.constant 0 : index
    %0 = vector.load %arg2[%c0, %c0_0] : memref<88x128xf32, #tpu.memory_space<vmem>>, vector<4x32xf32>
    %c8 = arith.constant 8 : index
    %c0_1 = arith.constant 0 : index
    %1 = vector.load %arg2[%c8, %c0_1] : memref<88x128xf32, #tpu.memory_space<vmem>>, vector<32x32xf32>
    %c40 = arith.constant 40 : index
    %c0_2 = arith.constant 0 : index
    %2 = vector.load %arg2[%c40, %c0_2] : memref<88x128xf32, #tpu.memory_space<vmem>>, vector<1x32xf32>
    %c48 = arith.constant 48 : index
    %c0_3 = arith.constant 0 : index
    %3 = vector.load %arg2[%c48, %c0_3] : memref<88x128xf32, #tpu.memory_space<vmem>>, vector<32x8xf32>
    %c80 = arith.constant 80 : index
    %c0_4 = arith.constant 0 : index
    %4 = vector.load %arg2[%c80, %c0_4] : memref<88x128xf32, #tpu.memory_space<vmem>>, vector<1x8xf32>
    %c0_5 = arith.constant 0 : index
    %c0_6 = arith.constant 0 : index
    %c0_7 = arith.constant 0 : index
    %5 = vector.load %arg1[%c0_5, %c0_6, %c0_7] : memref<8x8x4xf32, #tpu.memory_space<vmem>>, vector<8x8x4xf32>
    %6 = vector.shape_cast %5 : vector<8x8x4xf32> to vector<64x4xf32>
    %cst = arith.constant dense<0.000000e+00> : vector<64x32xf32>
    %7 = tpu.matmul %6, %0, %cst {dimension_numbers = #tpu.dot_dimension_numbers<[1], [0], [0], [1], [0, 0, 1, 1], [], []>} : vector<64x4xf32>, vector<4x32xf32>, vector<64x32xf32> -> vector<64x32xf32>
    %8 = vector.broadcast %2 : vector<1x32xf32> to vector<64x32xf32>
    %9 = arith.addf %7, %8 : vector<64x32xf32>
    %cst_8 = arith.constant 0.000000e+00 : f32
    %10 = vector.broadcast %cst_8 : f32 to vector<8x32xf32>
    %11 = vector.extract_strided_slice %9 {offsets = [0, 0], sizes = [8, 32], strides = [1, 1]} : vector<64x32xf32> to vector<8x32xf32>
    %cst_9 = arith.constant dense<0.000000e+00> : vector<8x32xf32>
    %12 = tpu.matmul %10, %1, %cst_9 {dimension_numbers = #tpu.dot_dimension_numbers<[1], [0], [0], [1], [0, 0, 1, 1], [], []>} : vector<8x32xf32>, vector<32x32xf32>, vector<8x32xf32> -> vector<8x32xf32>
    %13 = arith.addf %11, %12 : vector<8x32xf32>
    %14 = math.tanh %13 : vector<8x32xf32>
    %15 = vector.extract_strided_slice %9 {offsets = [8, 0], sizes = [8, 32], strides = [1, 1]} : vector<64x32xf32> to vector<8x32xf32>
    %cst_10 = arith.constant dense<0.000000e+00> : vector<8x32xf32>
    %16 = tpu.matmul %14, %1, %cst_10 {dimension_numbers = #tpu.dot_dimension_numbers<[1], [0], [0], [1], [0, 0, 1, 1], [], []>} : vector<8x32xf32>, vector<32x32xf32>, vector<8x32xf32> -> vector<8x32xf32>
    %17 = arith.addf %15, %16 : vector<8x32xf32>
    %18 = math.tanh %17 : vector<8x32xf32>
    %19 = vector.extract_strided_slice %9 {offsets = [16, 0], sizes = [8, 32], strides = [1, 1]} : vector<64x32xf32> to vector<8x32xf32>
    %cst_11 = arith.constant dense<0.000000e+00> : vector<8x32xf32>
    %20 = tpu.matmul %18, %1, %cst_11 {dimension_numbers = #tpu.dot_dimension_numbers<[1], [0], [0], [1], [0, 0, 1, 1], [], []>} : vector<8x32xf32>, vector<32x32xf32>, vector<8x32xf32> -> vector<8x32xf32>
    %21 = arith.addf %19, %20 : vector<8x32xf32>
    %22 = math.tanh %21 : vector<8x32xf32>
    %23 = vector.extract_strided_slice %9 {offsets = [24, 0], sizes = [8, 32], strides = [1, 1]} : vector<64x32xf32> to vector<8x32xf32>
    %cst_12 = arith.constant dense<0.000000e+00> : vector<8x32xf32>
    %24 = tpu.matmul %22, %1, %cst_12 {dimension_numbers = #tpu.dot_dimension_numbers<[1], [0], [0], [1], [0, 0, 1, 1], [], []>} : vector<8x32xf32>, vector<32x32xf32>, vector<8x32xf32> -> vector<8x32xf32>
    %25 = arith.addf %23, %24 : vector<8x32xf32>
    %26 = math.tanh %25 : vector<8x32xf32>
    %27 = vector.extract_strided_slice %9 {offsets = [32, 0], sizes = [8, 32], strides = [1, 1]} : vector<64x32xf32> to vector<8x32xf32>
    %cst_13 = arith.constant dense<0.000000e+00> : vector<8x32xf32>
    %28 = tpu.matmul %26, %1, %cst_13 {dimension_numbers = #tpu.dot_dimension_numbers<[1], [0], [0], [1], [0, 0, 1, 1], [], []>} : vector<8x32xf32>, vector<32x32xf32>, vector<8x32xf32> -> vector<8x32xf32>
    %29 = arith.addf %27, %28 : vector<8x32xf32>
    %30 = math.tanh %29 : vector<8x32xf32>
    %31 = vector.extract_strided_slice %9 {offsets = [40, 0], sizes = [8, 32], strides = [1, 1]} : vector<64x32xf32> to vector<8x32xf32>
    %cst_14 = arith.constant dense<0.000000e+00> : vector<8x32xf32>
    %32 = tpu.matmul %30, %1, %cst_14 {dimension_numbers = #tpu.dot_dimension_numbers<[1], [0], [0], [1], [0, 0, 1, 1], [], []>} : vector<8x32xf32>, vector<32x32xf32>, vector<8x32xf32> -> vector<8x32xf32>
    %33 = arith.addf %31, %32 : vector<8x32xf32>
    %34 = math.tanh %33 : vector<8x32xf32>
    %35 = vector.extract_strided_slice %9 {offsets = [48, 0], sizes = [8, 32], strides = [1, 1]} : vector<64x32xf32> to vector<8x32xf32>
    %cst_15 = arith.constant dense<0.000000e+00> : vector<8x32xf32>
    %36 = tpu.matmul %34, %1, %cst_15 {dimension_numbers = #tpu.dot_dimension_numbers<[1], [0], [0], [1], [0, 0, 1, 1], [], []>} : vector<8x32xf32>, vector<32x32xf32>, vector<8x32xf32> -> vector<8x32xf32>
    %37 = arith.addf %35, %36 : vector<8x32xf32>
    %38 = math.tanh %37 : vector<8x32xf32>
    %39 = vector.extract_strided_slice %9 {offsets = [56, 0], sizes = [8, 32], strides = [1, 1]} : vector<64x32xf32> to vector<8x32xf32>
    %cst_16 = arith.constant dense<0.000000e+00> : vector<8x32xf32>
    %40 = tpu.matmul %38, %1, %cst_16 {dimension_numbers = #tpu.dot_dimension_numbers<[1], [0], [0], [1], [0, 0, 1, 1], [], []>} : vector<8x32xf32>, vector<32x32xf32>, vector<8x32xf32> -> vector<8x32xf32>
    %41 = arith.addf %39, %40 : vector<8x32xf32>
    %42 = math.tanh %41 : vector<8x32xf32>
    %cst_17 = arith.constant dense<0.000000e+00> : vector<8x8xf32>
    %43 = tpu.matmul %42, %3, %cst_17 {dimension_numbers = #tpu.dot_dimension_numbers<[1], [0], [0], [1], [0, 0, 1, 1], [], []>} : vector<8x32xf32>, vector<32x8xf32>, vector<8x8xf32> -> vector<8x8xf32>
    %44 = vector.broadcast %4 : vector<1x8xf32> to vector<8x8xf32>
    %45 = arith.addf %43, %44 : vector<8x8xf32>
    %cst_18 = arith.constant dense<0xFF800000> : vector<8xf32>
    %46 = vector.multi_reduction <maximumf>, %45, %cst_18 [1] : vector<8x8xf32> to vector<8xf32>
    %47 = vector.shape_cast %46 : vector<8xf32> to vector<8x1xf32>
    %48 = vector.broadcast %47 : vector<8x1xf32> to vector<8x8xf32>
    %49 = arith.subf %45, %48 : vector<8x8xf32>
    %50 = math.exp %49 : vector<8x8xf32>
    %cst_19 = arith.constant dense<0.000000e+00> : vector<8xf32>
    %51 = vector.multi_reduction <add>, %50, %cst_19 [1] : vector<8x8xf32> to vector<8xf32>
    %52 = vector.shape_cast %51 : vector<8xf32> to vector<8x1xf32>
    %53 = math.log %52 : vector<8x1xf32>
    %54 = vector.broadcast %53 : vector<8x1xf32> to vector<8x8xf32>
    %55 = arith.subf %49, %54 : vector<8x8xf32>
    %c0_20 = arith.constant 0 : index
    %c0_21 = arith.constant 0 : index
    %56 = vector.load %arg3[%c0_20, %c0_21] : memref<8x8xf32, #tpu.memory_space<vmem>>, vector<8x8xf32>
    tpu.vector_store %arg3[%c0_20, %c0_21], %55 {strides = array<i32>} : memref<8x8xf32, #tpu.memory_space<vmem>>, vector<8x8xf32>,
    return
  }
  func.func @transform_0(%arg0: i32) -> (i32, i32, i32) {
    %c0_i32 = arith.constant 0 : i32
    %c0_i32_0 = arith.constant 0 : i32
    %c0_i32_1 = arith.constant 0 : i32
    return %c0_i32, %arg0, %c0_i32_0 : i32, i32, i32
  }
  func.func @transform_1(%arg0: i32) -> (i32, i32) {
    %c0_i32 = arith.constant 0 : i32
    %c0_i32_0 = arith.constant 0 : i32
    %c0_i32_1 = arith.constant 0 : i32
    return %c0_i32, %c0_i32_0 : i32, i32
  }
  func.func @transform_2(%arg0: i32) -> (i32, i32) {
    %c0_i32 = arith.constant 0 : i32
    %c0_i32_0 = arith.constant 0 : i32
    return %arg0, %c0_i32 : i32, i32
  }
}

</mosaic_0001>

<llo_original>
// kernel: tpu_custom_call.1
$region0: #{tpu_custom_call.1}
  #allocation0 [shape = 'u32[]', space=smem, size = 0x4, offset = 0x4, fixed_abs, tag = 'smem constant byte address 0x4 - core index']
  #allocation1 [shape = 'u32[144,128]{1,0:T(1,128)}', space=vmem, size = 0x12000, scoped, tag = 'internal scratch']
  %s0 = inlined_call_operand.vmem [shape: f32[8,8,4], index: 0, kind: input, shape index: {}]
  %s1 = inlined_call_operand.vmem [shape: f32[88,128], index: 1, kind: input, shape index: {}]
  %s2 = inlined_call_operand.hbm [shape: f32[8,8], index: 2, kind: output, shape index: {}]
  %s3 = sld [smem:[#allocation0]]
  $region18: #{tpu_custom_call.1} parent=0
    _
  %s5 = ssub.s32 1, %s3
  %s6 = scalar_select 0, %s5, %s3
  $region1: #{tpu_custom_call.1} parent=0
    #allocation2 [shape = 'u8[4096]{0}', space=vmem, size = 0x1000, scoped, tag = 'output window, operand 0, single buffered']
    #allocation3 [shape = 's32[1]{0}', space=sflag, size = 0x4, scoped, tag = 'scoped memory for tpu_custom_call.1']
    %7 = vsyncpa [#allocation3], 0
    // Predicated region
    $region2: #{tpu_custom_call.1} parent=1 // pred_check
      _
    $region3: #{tpu_custom_call.1} parent=1 // pred_check_branch
      %9 = sbr.rel (0) target = $region5
    $region4: #{tpu_custom_call.1} parent=1 // pred_region
      _
    $region5: #{tpu_custom_call.1} parent=1 // pred_fallthru
      _
    // Predicated region
    $region6: #{tpu_custom_call.1} parent=1 // pred_check
      _
    $region7: #{tpu_custom_call.1} parent=1 // pred_check_branch
      %11 = sbr.rel (0) target = $region9
    $region8: #{tpu_custom_call.1} parent=1 // pred_region
      _
    $region9: #{tpu_custom_call.1} parent=1 // pred_fallthru
      _
    %v12 = vld [vmem:[%s1] sm:$0xf]
    %v13 = vld [vmem:[%s1 + $0x8] sm:$0xff]
    %v14 = vld [vmem:[%s1 + $0x10] sm:$0xff]
    %v15 = vld [vmem:[%s1 + $0x18] sm:$0xff]
    %v16 = vld [vmem:[%s1 + $0x20] sm:$0xff]
    %v17 = vld [vmem:[%s1 + $0x28] sm:$0x1]
    %v18 = vld [vmem:[%s1 + $0x30] sm:$0xff]
    %v19 = vld [vmem:[%s1 + $0x38] sm:$0xff]
    %v20 = vld [vmem:[%s1 + $0x40] sm:$0xff]
    %v21 = vld [vmem:[%s1 + $0x48] sm:$0xff]
    %v22 = vld [vmem:[%s1 + $0x50] sm:$0x1]
    %v23 = vld [vmem:[%s0] sm:$0xff]
    %v24 = vld [vmem:[%s0 + $0x8] sm:$0xff]
    %v25 = vld [vmem:[%s0 + $0x10] sm:$0xff]
    %v26 = vld [vmem:[%s0 + $0x18] sm:$0xff]
    %v27 = vld [vmem:[%s0 + $0x20] sm:$0xff]
    %v28 = vld [vmem:[%s0 + $0x28] sm:$0xff]
    %v29 = vld [vmem:[%s0 + $0x30] sm:$0xff]
    %v30 = vld [vmem:[%s0 + $0x38] sm:$0xff]
    %v31 = vlaneseq
    %v32 = vshrl.u32 %v31, 7
    %v33 = vsub.s32 0, %v32
    %v34 = vrot.slane %v17, %v33
    %vm35 = vcmask 31744
    %v37 = vsel %vm35, %v23, 0
    %v40 = vsel %vm35, %v24, 0
    %v43 = vsel %vm35, %v25, 0
    %v46 = vsel %vm35, %v26, 0
    %v49 = vsel %vm35, %v27, 0
    %v52 = vsel %vm35, %v28, 0
    %v55 = vsel %vm35, %v29, 0
    %v58 = vsel %vm35, %v30, 0
    %vm60 = vcmask 1043456
    %v62 = vsel %vm60, %v12, 0
    %64 = vmatprep.subr.mxu0 0.0
    %65 = vmatpush1.msra.mxu0 %v62
    %66 = vmatprep.subr.mxu0 0.0
    %67 = vmatpush1.msra.mxu0 0.0
    %68 = vmatprep.subr.mxu0 0.0
    %69 = vmatpush1.msra.mxu0 0.0
    %70 = vmatprep.subr.mxu0 0.0
    %71 = vmatpush1.msra.mxu0 0.0
    %72 = vmatprep.subr.mxu0 0.0
    %73 = vmatpush1.msra.mxu0 0.0
    %74 = vmatprep.subr.mxu0 0.0
    %75 = vmatpush1.msra.mxu0 0.0
    %76 = vmatprep.subr.mxu0 0.0
    %77 = vmatpush1.msra.mxu0 0.0
    %78 = vmatprep.subr.mxu0 0.0
    %79 = vmatpush1.msra.mxu0 0.0
    %80 = vmatprep.subr.mxu0 0.0
    %81 = vmatpush1.msra.mxu0 0.0
    %82 = vmatprep.subr.mxu0 0.0
    %83 = vmatpush1.msra.mxu0 0.0
    %84 = vmatprep.subr.mxu0 0.0
    %85 = vmatpush1.msra.mxu0 0.0
    %86 = vmatprep.subr.mxu0 0.0
    %87 = vmatpush1.msra.mxu0 0.0
    %88 = vmatprep.subr.mxu0 0.0
    %89 = vmatpush1.msra.mxu0 0.0
    %90 = vmatprep.subr.mxu0 0.0
    %91 = vmatpush1.msra.mxu0 0.0
    %92 = vmatprep.subr.mxu0 0.0
    %93 = vmatpush1.msra.mxu0 0.0
    %94 = vmatprep.subr.mxu0 0.0
    %95 = vmatpush1.msra.mxu0 0.0
    %96 = vmatprep.subr.mxu0 0.0
    %97 = vmatpush1.msra.mxu0 0.0
    %98 = vmatprep.subr.mxu0 0.0
    %99 = vmatpush1.msra.mxu0 0.0
    %100 = vmatprep.subr.mxu0 0.0
    %101 = vmatpush1.msra.mxu0 0.0
    %102 = vmatprep.subr.mxu0 0.0
    %103 = vmatpush1.msra.mxu0 0.0
    %104 = vmatprep.subr.mxu0 0.0
    %105 = vmatpush1.msra.mxu0 0.0
    %106 = vmatprep.subr.mxu0 0.0
    %107 = vmatpush1.msra.mxu0 0.0
    %108 = vmatprep.subr.mxu0 0.0
    %109 = vmatpush1.msra.mxu0 0.0
    %110 = vmatprep.subr.mxu0 0.0
    %111 = vmatpush1.msra.mxu0 0.0
    %112 = vmatprep.subr.mxu0 0.0
    %113 = vmatpush1.msra.mxu0 0.0
    %114 = vmatprep.subr.mxu0 0.0
    %115 = vmatpush1.msra.mxu0 0.0
    %116 = vmatprep.subr.mxu0 0.0
    %117 = vmatpush1.msra.mxu0 0.0
    %118 = vmatprep.subr.mxu0 0.0
    %119 = vmatpush1.msra.mxu0 0.0
    %120 = vmatprep.subr.mxu0 0.0
    %121 = vmatpush1.msra.mxu0 0.0
    %122 = vmatprep.subr.mxu0 0.0
    %123 = vmatpush1.msra.mxu0 0.0
    %124 = vmatprep.subr.mxu0 0.0
    %125 = vmatpush1.msra.mxu0 0.0
    %126 = vmatprep.subr.mxu0 0.0
    %127 = vmatpush1.msra.mxu0 0.0
    %128 = vmatprep.mubr.f32.mxu0 0.0
    %129 = vmatmul.mubr.f32.gmra.mrb[0].mxu0 %v37
    %v130 = vpop.f32.mrb[0].mxu0
    %v131 = vadd.f32 %v34, %v130
    %v132 = vpop.f32.mrb[0].mxu0
    %133 = vmatprep.mubr.f32.mxu0 0.0
    %134 = vmatmul.mubr.f32.gmra.mrb[0].mxu0 %v40
    %v135 = vpop.f32.mrb[0].mxu0
    %v136 = vadd.f32 %v34, %v135
    %v137 = vpop.f32.mrb[0].mxu0
    %138 = vmatprep.mubr.f32.mxu0 0.0
    %139 = vmatmul.mubr.f32.gmra.mrb[0].mxu0 %v43
    %v140 = vpop.f32.mrb[0].mxu0
    %v141 = vadd.f32 %v34, %v140
    %v142 = vpop.f32.mrb[0].mxu0
    %143 = vmatprep.mubr.f32.mxu0 0.0
    %144 = vmatmul.mubr.f32.gmra.mrb[0].mxu0 %v46
    %v145 = vpop.f32.mrb[0].mxu0
    %v146 = vadd.f32 %v34, %v145
    %v147 = vpop.f32.mrb[0].mxu0
    %148 = vmatprep.mubr.f32.mxu0 0.0
    %149 = vmatmul.mubr.f32.gmra.mrb[0].mxu0 %v49
    %v150 = vpop.f32.mrb[0].mxu0
    %v151 = vadd.f32 %v34, %v150
    %v152 = vpop.f32.mrb[0].mxu0
    %153 = vmatprep.mubr.f32.mxu0 0.0
    %154 = vmatmul.mubr.f32.gmra.mrb[0].mxu0 %v52
    %v155 = vpop.f32.mrb[0].mxu0
    %v156 = vadd.f32 %v34, %v155
    %v157 = vpop.f32.mrb[0].mxu0
    %158 = vmatprep.mubr.f32.mxu0 0.0
    %159 = vmatmul.mubr.f32.gmra.mrb[0].mxu0 %v55
    %v160 = vpop.f32.mrb[0].mxu0
    %v161 = vadd.f32 %v34, %v160
    %v162 = vpop.f32.mrb[0].mxu0
    %163 = vmatprep.mubr.f32.mxu0 0.0
    %164 = vmatmul.mubr.f32.gmra.mrb[0].mxu0 %v58
    %v165 = vpop.f32.mrb[0].mxu0
    %v166 = vadd.f32 %v34, %v165
    %v167 = vpop.f32.mrb[0].mxu0
    %168 = vdwg.mxu0
    %vm169 = vcmask 261120
    %v171 = vsel %vm169, 0.0, 0
    %173 = vmatprep.subr.mxu0 0.0
    %174 = vmatpush1.msra.mxu0 %v13
    %175 = vmatprep.subr.mxu0 0.0
    %176 = vmatpush1.msra.mxu0 %v14
    %177 = vmatprep.subr.mxu0 0.0
    %178 = vmatpush1.msra.mxu0 %v15
    %179 = vmatprep.subr.mxu0 0.0
    %180 = vmatpush1.msra.mxu0 %v16
    %181 = vmatprep.subr.mxu0 0.0
    %182 = vmatpush1.msra.mxu0 0.0
    %183 = vmatprep.subr.mxu0 0.0
    %184 = vmatpush1.msra.mxu0 0.0
    %185 = vmatprep.subr.mxu0 0.0
    %186 = vmatpush1.msra.mxu0 0.0
    %187 = vmatprep.subr.mxu0 0.0
    %188 = vmatpush1.msra.mxu0 0.0
    %189 = vmatprep.subr.mxu0 0.0
    %190 = vmatpush1.msra.mxu0 0.0
    %191 = vmatprep.subr.mxu0 0.0
    %192 = vmatpush1.msra.mxu0 0.0
    %193 = vmatprep.subr.mxu0 0.0
    %194 = vmatpush1.msra.mxu0 0.0
    %195 = vmatprep.subr.mxu0 0.0
    %196 = vmatpush1.msra.mxu0 0.0
    %197 = vmatprep.subr.mxu0 0.0
    %198 = vmatpush1.msra.mxu0 0.0
    %199 = vmatprep.subr.mxu0 0.0
    %200 = vmatpush1.msra.mxu0 0.0
    %201 = vmatprep.subr.mxu0 0.0
    %202 = vmatpush1.msra.mxu0 0.0
    %203 = vmatprep.subr.mxu0 0.0
    %204 = vmatpush1.msra.mxu0 0.0
    %205 = vmatprep.subr.mxu0 0.0
    %206 = vmatpush1.msra.mxu0 0.0
    %207 = vmatprep.subr.mxu0 0.0
    %208 = vmatpush1.msra.mxu0 0.0
    %209 = vmatprep.subr.mxu0 0.0
    %210 = vmatpush1.msra.mxu0 0.0
    %211 = vmatprep.subr.mxu0 0.0
    %212 = vmatpush1.msra.mxu0 0.0
    %213 = vmatprep.subr.mxu0 0.0
    %214 = vmatpush1.msra.mxu0 0.0
    %215 = vmatprep.subr.mxu0 0.0
    %216 = vmatpush1.msra.mxu0 0.0
    %217 = vmatprep.subr.mxu0 0.0
    %218 = vmatpush1.msra.mxu0 0.0
    %219 = vmatprep.subr.mxu0 0.0
    %220 = vmatpush1.msra.mxu0 0.0
    %221 = vmatprep.subr.mxu0 0.0
    %222 = vmatpush1.msra.mxu0 0.0
    %223 = vmatprep.subr.mxu0 0.0
    %224 = vmatpush1.msra.mxu0 0.0
    %225 = vmatprep.subr.mxu0 0.0
    %226 = vmatpush1.msra.mxu0 0.0
    %227 = vmatprep.subr.mxu0 0.0
    %228 = vmatpush1.msra.mxu0 0.0
    %229 = vmatprep.subr.mxu0 0.0
    %230 = vmatpush1.msra.mxu0 0.0
    %231 = vmatprep.subr.mxu0 0.0
    %232 = vmatpush1.msra.mxu0 0.0
    %233 = vmatprep.subr.mxu0 0.0
    %234 = vmatpush1.msra.mxu0 0.0
    %235 = vmatprep.subr.mxu0 0.0
    %236 = vmatpush1.msra.mxu0 0.0
    %237 = vmatprep.mubr.f32.mxu0 0.0
    %238 = vmatmul.mubr.f32.gmra.mrb[0].mxu0 %v171
    %v239 = vpop.f32.mrb[0].mxu0
    %v240 = vadd.f32 0.0, %v239
    %v241 = vpop.f32.mrb[0].mxu0
    %242 = vdwg.mxu0
    %v243 = vadd.f32 %v131, %v240
    %v244 = vtanh.pop %v243
    %v246 = vsel %vm169, %v244, 0
    %248 = vmatprep.subr.mxu0 0.0
    %249 = vmatpush1.msra.mxu0 %v13
    %250 = vmatprep.subr.mxu0 0.0
    %251 = vmatpush1.msra.mxu0 %v14
    %252 = vmatprep.subr.mxu0 0.0
    %253 = vmatpush1.msra.mxu0 %v15
    %254 = vmatprep.subr.mxu0 0.0
    %255 = vmatpush1.msra.mxu0 %v16
    %256 = vmatprep.subr.mxu0 0.0
    %257 = vmatpush1.msra.mxu0 0.0
    %258 = vmatprep.subr.mxu0 0.0
    %259 = vmatpush1.msra.mxu0 0.0
    %260 = vmatprep.subr.mxu0 0.0
    %261 = vmatpush1.msra.mxu0 0.0
    %262 = vmatprep.subr.mxu0 0.0
    %263 = vmatpush1.msra.mxu0 0.0
    %264 = vmatprep.subr.mxu0 0.0
    %265 = vmatpush1.msra.mxu0 0.0
    %266 = vmatprep.subr.mxu0 0.0
    %267 = vmatpush1.msra.mxu0 0.0
    %268 = vmatprep.subr.mxu0 0.0
    %269 = vmatpush1.msra.mxu0 0.0
    %270 = vmatprep.subr.mxu0 0.0
    %271 = vmatpush1.msra.mxu0 0.0
    %272 = vmatprep.subr.mxu0 0.0
    %273 = vmatpush1.msra.mxu0 0.0
    %274 = vmatprep.subr.mxu0 0.0
    %275 = vmatpush1.msra.mxu0 0.0
    %276 = vmatprep.subr.mxu0 0.0
    %277 = vmatpush1.msra.mxu0 0.0
    %278 = vmatprep.subr.mxu0 0.0
    %279 = vmatpush1.msra.mxu0 0.0
    %280 = vmatprep.subr.mxu0 0.0
    %281 = vmatpush1.msra.mxu0 0.0
    %282 = vmatprep.subr.mxu0 0.0
    %283 = vmatpush1.msra.mxu0 0.0
    %284 = vmatprep.subr.mxu0 0.0
    %285 = vmatpush1.msra.mxu0 0.0
    %286 = vmatprep.subr.mxu0 0.0
    %287 = vmatpush1.msra.mxu0 0.0
    %288 = vmatprep.subr.mxu0 0.0
    %289 = vmatpush1.msra.mxu0 0.0
    %290 = vmatprep.subr.mxu0 0.0
    %291 = vmatpush1.msra.mxu0 0.0
    %292 = vmatprep.subr.mxu0 0.0
    %293 = vmatpush1.msra.mxu0 0.0
    %294 = vmatprep.subr.mxu0 0.0
    %295 = vmatpush1.msra.mxu0 0.0
    %296 = vmatprep.subr.mxu0 0.0
    %297 = vmatpush1.msra.mxu0 0.0
    %298 = vmatprep.subr.mxu0 0.0
    %299 = vmatpush1.msra.mxu0 0.0
    %300 = vmatprep.subr.mxu0 0.0
    %301 = vmatpush1.msra.mxu0 0.0
    %302 = vmatprep.subr.mxu0 0.0
    %303 = vmatpush1.msra.mxu0 0.0
    %304 = vmatprep.subr.mxu0 0.0
    %305 = vmatpush1.msra.mxu0 0.0
    %306 = vmatprep.subr.mxu0 0.0
    %307 = vmatpush1.msra.mxu0 0.0
    %308 = vmatprep.subr.mxu0 0.0
    %309 = vmatpush1.msra.mxu0 0.0
    %310 = vmatprep.subr.mxu0 0.0
    %311 = vmatpush1.msra.mxu0 0.0
    %312 = vmatprep.mubr.f32.mxu0 0.0
    %313 = vmatmul.mubr.f32.gmra.mrb[0].mxu0 %v246
    %v314 = vpop.f32.mrb[0].mxu0
    %v315 = vadd.f32 0.0, %v314
    %v316 = vpop.f32.mrb[0].mxu0
    %317 = vdwg.mxu0
    %v318 = vadd.f32 %v136, %v315
    %v319 = vtanh.pop %v318
    %v321 = vsel %vm169, %v319, 0
    %323 = vmatprep.subr.mxu0 0.0
    %324 = vmatpush1.msra.mxu0 %v13
    %325 = vmatprep.subr.mxu0 0.0
    %326 = vmatpush1.msra.mxu0 %v14
    %327 = vmatprep.subr.mxu0 0.0
    %328 = vmatpush1.msra.mxu0 %v15
    %329 = vmatprep.subr.mxu0 0.0
    %330 = vmatpush1.msra.mxu0 %v16
    %331 = vmatprep.subr.mxu0 0.0
    %332 = vmatpush1.msra.mxu0 0.0
    %333 = vmatprep.subr.mxu0 0.0
    %334 = vmatpush1.msra.mxu0 0.0
    %335 = vmatprep.subr.mxu0 0.0
    %336 = vmatpush1.msra.mxu0 0.0
    %337 = vmatprep.subr.mxu0 0.0
    %338 = vmatpush1.msra.mxu0 0.0
    %339 = vmatprep.subr.mxu0 0.0
    %340 = vmatpush1.msra.mxu0 0.0
    %341 = vmatprep.subr.mxu0 0.0
    %342 = vmatpush1.msra.mxu0 0.0
    %343 = vmatprep.subr.mxu0 0.0
    %344 = vmatpush1.msra.mxu0 0.0
    %345 = vmatprep.subr.mxu0 0.0
    %346 = vmatpush1.msra.mxu0 0.0
    %347 = vmatprep.subr.mxu0 0.0
    %348 = vmatpush1.msra.mxu0 0.0
    %349 = vmatprep.subr.mxu0 0.0
    %350 = vmatpush1.msra.mxu0 0.0
    %351 = vmatprep.subr.mxu0 0.0
    %352 = vmatpush1.msra.mxu0 0.0
    %353 = vmatprep.subr.mxu0 0.0
    %354 = vmatpush1.msra.mxu0 0.0
    %355 = vmatprep.subr.mxu0 0.0
    %356 = vmatpush1.msra.mxu0 0.0
    %357 = vmatprep.subr.mxu0 0.0
    %358 = vmatpush1.msra.mxu0 0.0
    %359 = vmatprep.subr.mxu0 0.0
    %360 = vmatpush1.msra.mxu0 0.0
    %361 = vmatprep.subr.mxu0 0.0
    %362 = vmatpush1.msra.mxu0 0.0
    %363 = vmatprep.subr.mxu0 0.0
    %364 = vmatpush1.msra.mxu0 0.0
    %365 = vmatprep.subr.mxu0 0.0
    %366 = vmatpush1.msra.mxu0 0.0
    %367 = vmatprep.subr.mxu0 0.0
    %368 = vmatpush1.msra.mxu0 0.0
    %369 = vmatprep.subr.mxu0 0.0
    %370 = vmatpush1.msra.mxu0 0.0
    %371 = vmatprep.subr.mxu0 0.0
    %372 = vmatpush1.msra.mxu0 0.0
    %373 = vmatprep.subr.mxu0 0.0
    %374 = vmatpush1.msra.mxu0 0.0
    %375 = vmatprep.subr.mxu0 0.0
    %376 = vmatpush1.msra.mxu0 0.0
    %377 = vmatprep.subr.mxu0 0.0
    %378 = vmatpush1.msra.mxu0 0.0
    %379 = vmatprep.subr.mxu0 0.0
    %380 = vmatpush1.msra.mxu0 0.0
    %381 = vmatprep.subr.mxu0 0.0
    %382 = vmatpush1.msra.mxu0 0.0
    %383 = vmatprep.subr.mxu0 0.0
    %384 = vmatpush1.msra.mxu0 0.0
    %385 = vmatprep.subr.mxu0 0.0
    %386 = vmatpush1.msra.mxu0 0.0
    %387 = vmatprep.mubr.f32.mxu0 0.0
    %388 = vmatmul.mubr.f32.gmra.mrb[0].mxu0 %v321
    %v389 = vpop.f32.mrb[0].mxu0
    %v390 = vadd.f32 0.0, %v389
    %v391 = vpop.f32.mrb[0].mxu0
    %392 = vdwg.mxu0
    %v393 = vadd.f32 %v141, %v390
    %v394 = vtanh.pop %v393
    %v396 = vsel %vm169, %v394, 0
    %398 = vmatprep.subr.mxu0 0.0
    %399 = vmatpush1.msra.mxu0 %v13
    %400 = vmatprep.subr.mxu0 0.0
    %401 = vmatpush1.msra.mxu0 %v14
    %402 = vmatprep.subr.mxu0 0.0
    %403 = vmatpush1.msra.mxu0 %v15
    %404 = vmatprep.subr.mxu0 0.0
    %405 = vmatpush1.msra.mxu0 %v16
    %406 = vmatprep.subr.mxu0 0.0
    %407 = vmatpush1.msra.mxu0 0.0
    %408 = vmatprep.subr.mxu0 0.0
    %409 = vmatpush1.msra.mxu0 0.0
    %410 = vmatprep.subr.mxu0 0.0
    %411 = vmatpush1.msra.mxu0 0.0
    %412 = vmatprep.subr.mxu0 0.0
    %413 = vmatpush1.msra.mxu0 0.0
    %414 = vmatprep.subr.mxu0 0.0
    %415 = vmatpush1.msra.mxu0 0.0
    %416 = vmatprep.subr.mxu0 0.0
    %417 = vmatpush1.msra.mxu0 0.0
    %418 = vmatprep.subr.mxu0 0.0
    %419 = vmatpush1.msra.mxu0 0.0
    %420 = vmatprep.subr.mxu0 0.0
    %421 = vmatpush1.msra.mxu0 0.0
    %422 = vmatprep.subr.mxu0 0.0
    %423 = vmatpush1.msra.mxu0 0.0
    %424 = vmatprep.subr.mxu0 0.0
    %425 = vmatpush1.msra.mxu0 0.0
    %426 = vmatprep.subr.mxu0 0.0
    %427 = vmatpush1.msra.mxu0 0.0
    %428 = vmatprep.subr.mxu0 0.0
    %429 = vmatpush1.msra.mxu0 0.0
    %430 = vmatprep.subr.mxu0 0.0
    %431 = vmatpush1.msra.mxu0 0.0
    %432 = vmatprep.subr.mxu0 0.0
    %433 = vmatpush1.msra.mxu0 0.0
    %434 = vmatprep.subr.mxu0 0.0
    %435 = vmatpush1.msra.mxu0 0.0
    %436 = vmatprep.subr.mxu0 0.0
    %437 = vmatpush1.msra.mxu0 0.0
    %438 = vmatprep.subr.mxu0 0.0
    %439 = vmatpush1.msra.mxu0 0.0
    %440 = vmatprep.subr.mxu0 0.0
    %441 = vmatpush1.msra.mxu0 0.0
    %442 = vmatprep.subr.mxu0 0.0
    %443 = vmatpush1.msra.mxu0 0.0
    %444 = vmatprep.subr.mxu0 0.0
    %445 = vmatpush1.msra.mxu0 0.0
    %446 = vmatprep.subr.mxu0 0.0
    %447 = vmatpush1.msra.mxu0 0.0
    %448 = vmatprep.subr.mxu0 0.0
    %449 = vmatpush1.msra.mxu0 0.0
    %450 = vmatprep.subr.mxu0 0.0
    %451 = vmatpush1.msra.mxu0 0.0
    %452 = vmatprep.subr.mxu0 0.0
    %453 = vmatpush1.msra.mxu0 0.0
    %454 = vmatprep.subr.mxu0 0.0
    %455 = vmatpush1.msra.mxu0 0.0
    %456 = vmatprep.subr.mxu0 0.0
    %457 = vmatpush1.msra.mxu0 0.0
    %458 = vmatprep.subr.mxu0 0.0
    %459 = vmatpush1.msra.mxu0 0.0
    %460 = vmatprep.subr.mxu0 0.0
    %461 = vmatpush1.msra.mxu0 0.0
    %462 = vmatprep.mubr.f32.mxu0 0.0
    %463 = vmatmul.mubr.f32.gmra.mrb[0].mxu0 %v396
    %v464 = vpop.f32.mrb[0].mxu0
    %v465 = vadd.f32 0.0, %v464
    %v466 = vpop.f32.mrb[0].mxu0
    %467 = vdwg.mxu0
    %v468 = vadd.f32 %v146, %v465
    %v469 = vtanh.pop %v468
    %v471 = vsel %vm169, %v469, 0
    %473 = vmatprep.subr.mxu0 0.0
    %474 = vmatpush1.msra.mxu0 %v13
    %475 = vmatprep.subr.mxu0 0.0
    %476 = vmatpush1.msra.mxu0 %v14
    %477 = vmatprep.subr.mxu0 0.0
    %478 = vmatpush1.msra.mxu0 %v15
    %479 = vmatprep.subr.mxu0 0.0
    %480 = vmatpush1.msra.mxu0 %v16
    %481 = vmatprep.subr.mxu0 0.0
    %482 = vmatpush1.msra.mxu0 0.0
    %483 = vmatprep.subr.mxu0 0.0
    %484 = vmatpush1.msra.mxu0 0.0
    %485 = vmatprep.subr.mxu0 0.0
    %486 = vmatpush1.msra.mxu0 0.0
    %487 = vmatprep.subr.mxu0 0.0
    %488 = vmatpush1.msra.mxu0 0.0
    %489 = vmatprep.subr.mxu0 0.0
    %490 = vmatpush1.msra.mxu0 0.0
    %491 = vmatprep.subr.mxu0 0.0
    %492 = vmatpush1.msra.mxu0 0.0
    %493 = vmatprep.subr.mxu0 0.0
    %494 = vmatpush1.msra.mxu0 0.0
    %495 = vmatprep.subr.mxu0 0.0
    %496 = vmatpush1.msra.mxu0 0.0
    %497 = vmatprep.subr.mxu0 0.0
    %498 = vmatpush1.msra.mxu0 0.0
    %499 = vmatprep.subr.mxu0 0.0
    %500 = vmatpush1.msra.mxu0 0.0
    %501 = vmatprep.subr.mxu0 0.0
    %502 = vmatpush1.msra.mxu0 0.0
    %503 = vmatprep.subr.mxu0 0.0
    %504 = vmatpush1.msra.mxu0 0.0
    %505 = vmatprep.subr.mxu0 0.0
    %506 = vmatpush1.msra.mxu0 0.0
    %507 = vmatprep.subr.mxu0 0.0
    %508 = vmatpush1.msra.mxu0 0.0
    %509 = vmatprep.subr.mxu0 0.0
    %510 = vmatpush1.msra.mxu0 0.0
    %511 = vmatprep.subr.mxu0 0.0
    %512 = vmatpush1.msra.mxu0 0.0
    %513 = vmatprep.subr.mxu0 0.0
    %514 = vmatpush1.msra.mxu0 0.0
    %515 = vmatprep.subr.mxu0 0.0
    %516 = vmatpush1.msra.mxu0 0.0
    %517 = vmatprep.subr.mxu0 0.0
    %518 = vmatpush1.msra.mxu0 0.0
    %519 = vmatprep.subr.mxu0 0.0
    %520 = vmatpush1.msra.mxu0 0.0
    %521 = vmatprep.subr.mxu0 0.0
    %522 = vmatpush1.msra.mxu0 0.0
    %523 = vmatprep.subr.mxu0 0.0
    %524 = vmatpush1.msra.mxu0 0.0
    %525 = vmatprep.subr.mxu0 0.0
    %526 = vmatpush1.msra.mxu0 0.0
    %527 = vmatprep.subr.mxu0 0.0
    %528 = vmatpush1.msra.mxu0 0.0
    %529 = vmatprep.subr.mxu0 0.0
    %530 = vmatpush1.msra.mxu0 0.0
    %531 = vmatprep.subr.mxu0 0.0
    %532 = vmatpush1.msra.mxu0 0.0
    %533 = vmatprep.subr.mxu0 0.0
    %534 = vmatpush1.msra.mxu0 0.0
    %535 = vmatprep.subr.mxu0 0.0
    %536 = vmatpush1.msra.mxu0 0.0
    %537 = vmatprep.mubr.f32.mxu0 0.0
    %538 = vmatmul.mubr.f32.gmra.mrb[0].mxu0 %v471
    %v539 = vpop.f32.mrb[0].mxu0
    %v540 = vadd.f32 0.0, %v539
    %v541 = vpop.f32.mrb[0].mxu0
    %542 = vdwg.mxu0
    %v543 = vadd.f32 %v151, %v540
    %v544 = vtanh.pop %v543
    %v546 = vsel %vm169, %v544, 0
    %548 = vmatprep.subr.mxu0 0.0
    %549 = vmatpush1.msra.mxu0 %v13
    %550 = vmatprep.subr.mxu0 0.0
    %551 = vmatpush1.msra.mxu0 %v14
    %552 = vmatprep.subr.mxu0 0.0
    %553 = vmatpush1.msra.mxu0 %v15
    %554 = vmatprep.subr.mxu0 0.0
    %555 = vmatpush1.msra.mxu0 %v16
    %556 = vmatprep.subr.mxu0 0.0
    %557 = vmatpush1.msra.mxu0 0.0
    %558 = vmatprep.subr.mxu0 0.0
    %559 = vmatpush1.msra.mxu0 0.0
    %560 = vmatprep.subr.mxu0 0.0
    %561 = vmatpush1.msra.mxu0 0.0
    %562 = vmatprep.subr.mxu0 0.0
    %563 = vmatpush1.msra.mxu0 0.0
    %564 = vmatprep.subr.mxu0 0.0
    %565 = vmatpush1.msra.mxu0 0.0
    %566 = vmatprep.subr.mxu0 0.0
    %567 = vmatpush1.msra.mxu0 0.0
    %568 = vmatprep.subr.mxu0 0.0
    %569 = vmatpush1.msra.mxu0 0.0
    %570 = vmatprep.subr.mxu0 0.0
    %571 = vmatpush1.msra.mxu0 0.0
    %572 = vmatprep.subr.mxu0 0.0
    %573 = vmatpush1.msra.mxu0 0.0
    %574 = vmatprep.subr.mxu0 0.0
    %575 = vmatpush1.msra.mxu0 0.0
    %576 = vmatprep.subr.mxu0 0.0
    %577 = vmatpush1.msra.mxu0 0.0
    %578 = vmatprep.subr.mxu0 0.0
    %579 = vmatpush1.msra.mxu0 0.0
    %580 = vmatprep.subr.mxu0 0.0
    %581 = vmatpush1.msra.mxu0 0.0
    %582 = vmatprep.subr.mxu0 0.0
    %583 = vmatpush1.msra.mxu0 0.0
    %584 = vmatprep.subr.mxu0 0.0
    %585 = vmatpush1.msra.mxu0 0.0
    %586 = vmatprep.subr.mxu0 0.0
    %587 = vmatpush1.msra.mxu0 0.0
    %588 = vmatprep.subr.mxu0 0.0
    %589 = vmatpush1.msra.mxu0 0.0
    %590 = vmatprep.subr.mxu0 0.0
    %591 = vmatpush1.msra.mxu0 0.0
    %592 = vmatprep.subr.mxu0 0.0
    %593 = vmatpush1.msra.mxu0 0.0
    %594 = vmatprep.subr.mxu0 0.0
    %595 = vmatpush1.msra.mxu0 0.0
    %596 = vmatprep.subr.mxu0 0.0
    %597 = vmatpush1.msra.mxu0 0.0
    %598 = vmatprep.subr.mxu0 0.0
    %599 = vmatpush1.msra.mxu0 0.0
    %600 = vmatprep.subr.mxu0 0.0
    %601 = vmatpush1.msra.mxu0 0.0
    %602 = vmatprep.subr.mxu0 0.0
    %603 = vmatpush1.msra.mxu0 0.0
    %604 = vmatprep.subr.mxu0 0.0
    %605 = vmatpush1.msra.mxu0 0.0
    %606 = vmatprep.subr.mxu0 0.0
    %607 = vmatpush1.msra.mxu0 0.0
    %608 = vmatprep.subr.mxu0 0.0
    %609 = vmatpush1.msra.mxu0 0.0
    %610 = vmatprep.subr.mxu0 0.0
    %611 = vmatpush1.msra.mxu0 0.0
    %612 = vmatprep.mubr.f32.mxu0 0.0
    %613 = vmatmul.mubr.f32.gmra.mrb[0].mxu0 %v546
    %v614 = vpop.f32.mrb[0].mxu0
    %v615 = vadd.f32 0.0, %v614
    %v616 = vpop.f32.mrb[0].mxu0
    %617 = vdwg.mxu0
    %v618 = vadd.f32 %v156, %v615
    %v619 = vtanh.pop %v618
    %v621 = vsel %vm169, %v619, 0
    %623 = vmatprep.subr.mxu0 0.0
    %624 = vmatpush1.msra.mxu0 %v13
    %625 = vmatprep.subr.mxu0 0.0
    %626 = vmatpush1.msra.mxu0 %v14
    %627 = vmatprep.subr.mxu0 0.0
    %628 = vmatpush1.msra.mxu0 %v15
    %629 = vmatprep.subr.mxu0 0.0
    %630 = vmatpush1.msra.mxu0 %v16
    %631 = vmatprep.subr.mxu0 0.0
    %632 = vmatpush1.msra.mxu0 0.0
    %633 = vmatprep.subr.mxu0 0.0
    %634 = vmatpush1.msra.mxu0 0.0
    %635 = vmatprep.subr.mxu0 0.0
    %636 = vmatpush1.msra.mxu0 0.0
    %637 = vmatprep.subr.mxu0 0.0
    %638 = vmatpush1.msra.mxu0 0.0
    %639 = vmatprep.subr.mxu0 0.0
    %640 = vmatpush1.msra.mxu0 0.0
    %641 = vmatprep.subr.mxu0 0.0
    %642 = vmatpush1.msra.mxu0 0.0
    %643 = vmatprep.subr.mxu0 0.0
    %644 = vmatpush1.msra.mxu0 0.0
    %645 = vmatprep.subr.mxu0 0.0
    %646 = vmatpush1.msra.mxu0 0.0
    %647 = vmatprep.subr.mxu0 0.0
    %648 = vmatpush1.msra.mxu0 0.0
    %649 = vmatprep.subr.mxu0 0.0
    %650 = vmatpush1.msra.mxu0 0.0
    %651 = vmatprep.subr.mxu0 0.0
    %652 = vmatpush1.msra.mxu0 0.0
    %653 = vmatprep.subr.mxu0 0.0
    %654 = vmatpush1.msra.mxu0 0.0
    %655 = vmatprep.subr.mxu0 0.0
    %656 = vmatpush1.msra.mxu0 0.0
    %657 = vmatprep.subr.mxu0 0.0
    %658 = vmatpush1.msra.mxu0 0.0
    %659 = vmatprep.subr.mxu0 0.0
    %660 = vmatpush1.msra.mxu0 0.0
    %661 = vmatprep.subr.mxu0 0.0
    %662 = vmatpush1.msra.mxu0 0.0
    %663 = vmatprep.subr.mxu0 0.0
    %664 = vmatpush1.msra.mxu0 0.0
    %665 = vmatprep.subr.mxu0 0.0
    %666 = vmatpush1.msra.mxu0 0.0
    %667 = vmatprep.subr.mxu0 0.0
    %668 = vmatpush1.msra.mxu0 0.0
    %669 = vmatprep.subr.mxu0 0.0
    %670 = vmatpush1.msra.mxu0 0.0
    %671 = vmatprep.subr.mxu0 0.0
    %672 = vmatpush1.msra.mxu0 0.0
    %673 = vmatprep.subr.mxu0 0.0
    %674 = vmatpush1.msra.mxu0 0.0
    %675 = vmatprep.subr.mxu0 0.0
    %676 = vmatpush1.msra.mxu0 0.0
    %677 = vmatprep.subr.mxu0 0.0
    %678 = vmatpush1.msra.mxu0 0.0
    %679 = vmatprep.subr.mxu0 0.0
    %680 = vmatpush1.msra.mxu0 0.0
    %681 = vmatprep.subr.mxu0 0.0
    %682 = vmatpush1.msra.mxu0 0.0
    %683 = vmatprep.subr.mxu0 0.0
    %684 = vmatpush1.msra.mxu0 0.0
    %685 = vmatprep.subr.mxu0 0.0
    %686 = vmatpush1.msra.mxu0 0.0
    %687 = vmatprep.mubr.f32.mxu0 0.0
    %688 = vmatmul.mubr.f32.gmra.mrb[0].mxu0 %v621
    %v689 = vpop.f32.mrb[0].mxu0
    %v690 = vadd.f32 0.0, %v689
    %v691 = vpop.f32.mrb[0].mxu0
    %692 = vdwg.mxu0
    %v693 = vadd.f32 %v161, %v690
    %v694 = vtanh.pop %v693
    %v696 = vsel %vm169, %v694, 0
    %698 = vmatprep.subr.mxu0 0.0
    %699 = vmatpush1.msra.mxu0 %v13
    %700 = vmatprep.subr.mxu0 0.0
    %701 = vmatpush1.msra.mxu0 %v14
    %702 = vmatprep.subr.mxu0 0.0
    %703 = vmatpush1.msra.mxu0 %v15
    %704 = vmatprep.subr.mxu0 0.0
    %705 = vmatpush1.msra.mxu0 %v16
    %706 = vmatprep.subr.mxu0 0.0
    %707 = vmatpush1.msra.mxu0 0.0
    %708 = vmatprep.subr.mxu0 0.0
    %709 = vmatpush1.msra.mxu0 0.0
    %710 = vmatprep.subr.mxu0 0.0
    %711 = vmatpush1.msra.mxu0 0.0
    %712 = vmatprep.subr.mxu0 0.0
    %713 = vmatpush1.msra.mxu0 0.0
    %714 = vmatprep.subr.mxu0 0.0
    %715 = vmatpush1.msra.mxu0 0.0
    %716 = vmatprep.subr.mxu0 0.0
    %717 = vmatpush1.msra.mxu0 0.0
    %718 = vmatprep.subr.mxu0 0.0
    %719 = vmatpush1.msra.mxu0 0.0
    %720 = vmatprep.subr.mxu0 0.0
    %721 = vmatpush1.msra.mxu0 0.0
    %722 = vmatprep.subr.mxu0 0.0
    %723 = vmatpush1.msra.mxu0 0.0
    %724 = vmatprep.subr.mxu0 0.0
    %725 = vmatpush1.msra.mxu0 0.0
    %726 = vmatprep.subr.mxu0 0.0
    %727 = vmatpush1.msra.mxu0 0.0
    %728 = vmatprep.subr.mxu0 0.0
    %729 = vmatpush1.msra.mxu0 0.0
    %730 = vmatprep.subr.mxu0 0.0
    %731 = vmatpush1.msra.mxu0 0.0
    %732 = vmatprep.subr.mxu0 0.0
    %733 = vmatpush1.msra.mxu0 0.0
    %734 = vmatprep.subr.mxu0 0.0
    %735 = vmatpush1.msra.mxu0 0.0
    %736 = vmatprep.subr.mxu0 0.0
    %737 = vmatpush1.msra.mxu0 0.0
    %738 = vmatprep.subr.mxu0 0.0
    %739 = vmatpush1.msra.mxu0 0.0
    %740 = vmatprep.subr.mxu0 0.0
    %741 = vmatpush1.msra.mxu0 0.0
    %742 = vmatprep.subr.mxu0 0.0
    %743 = vmatpush1.msra.mxu0 0.0
    %744 = vmatprep.subr.mxu0 0.0
    %745 = vmatpush1.msra.mxu0 0.0
    %746 = vmatprep.subr.mxu0 0.0
    %747 = vmatpush1.msra.mxu0 0.0
    %748 = vmatprep.subr.mxu0 0.0
    %749 = vmatpush1.msra.mxu0 0.0
    %750 = vmatprep.subr.mxu0 0.0
    %751 = vmatpush1.msra.mxu0 0.0
    %752 = vmatprep.subr.mxu0 0.0
    %753 = vmatpush1.msra.mxu0 0.0
    %754 = vmatprep.subr.mxu0 0.0
    %755 = vmatpush1.msra.mxu0 0.0
    %756 = vmatprep.subr.mxu0 0.0
    %757 = vmatpush1.msra.mxu0 0.0
    %758 = vmatprep.subr.mxu0 0.0
    %759 = vmatpush1.msra.mxu0 0.0
    %760 = vmatprep.subr.mxu0 0.0
    %761 = vmatpush1.msra.mxu0 0.0
    %762 = vmatprep.mubr.f32.mxu0 0.0
    %763 = vmatmul.mubr.f32.gmra.mrb[0].mxu0 %v696
    %v764 = vpop.f32.mrb[0].mxu0
    %v765 = vadd.f32 0.0, %v764
    %v766 = vpop.f32.mrb[0].mxu0
    %767 = vdwg.mxu0
    %v768 = vadd.f32 %v166, %v765
    %v769 = vtanh.pop %v768
    %v770 = vlaneseq
    %v771 = vshrl.u32 %v770, 7
    %v772 = vsub.s32 0, %v771
    %v773 = vrot.slane %v22, %v772
    %v775 = vsel %vm169, %v769, 0
    %777 = vmatprep.subr.mxu0 0.0
    %778 = vmatpush1.msra.mxu0 %v18
    %779 = vmatprep.subr.mxu0 0.0
    %780 = vmatpush1.msra.mxu0 %v19
    %781 = vmatprep.subr.mxu0 0.0
    %782 = vmatpush1.msra.mxu0 %v20
    %783 = vmatprep.subr.mxu0 0.0
    %784 = vmatpush1.msra.mxu0 %v21
    %785 = vmatprep.subr.mxu0 0.0
    %786 = vmatpush1.msra.mxu0 0.0
    %787 = vmatprep.subr.mxu0 0.0
    %788 = vmatpush1.msra.mxu0 0.0
    %789 = vmatprep.subr.mxu0 0.0
    %790 = vmatpush1.msra.mxu0 0.0
    %791 = vmatprep.subr.mxu0 0.0
    %792 = vmatpush1.msra.mxu0 0.0
    %793 = vmatprep.subr.mxu0 0.0
    %794 = vmatpush1.msra.mxu0 0.0
    %795 = vmatprep.subr.mxu0 0.0
    %796 = vmatpush1.msra.mxu0 0.0
    %797 = vmatprep.subr.mxu0 0.0
    %798 = vmatpush1.msra.mxu0 0.0
    %799 = vmatprep.subr.mxu0 0.0
    %800 = vmatpush1.msra.mxu0 0.0
    %801 = vmatprep.subr.mxu0 0.0
    %802 = vmatpush1.msra.mxu0 0.0
    %803 = vmatprep.subr.mxu0 0.0
    %804 = vmatpush1.msra.mxu0 0.0
    %805 = vmatprep.subr.mxu0 0.0
    %806 = vmatpush1.msra.mxu0 0.0
    %807 = vmatprep.subr.mxu0 0.0
    %808 = vmatpush1.msra.mxu0 0.0
    %809 = vmatprep.subr.mxu0 0.0
    %810 = vmatpush1.msra.mxu0 0.0
    %811 = vmatprep.subr.mxu0 0.0
    %812 = vmatpush1.msra.mxu0 0.0
    %813 = vmatprep.subr.mxu0 0.0
    %814 = vmatpush1.msra.mxu0 0.0
    %815 = vmatprep.subr.mxu0 0.0
    %816 = vmatpush1.msra.mxu0 0.0
    %817 = vmatprep.subr.mxu0 0.0
    %818 = vmatpush1.msra.mxu0 0.0
    %819 = vmatprep.subr.mxu0 0.0
    %820 = vmatpush1.msra.mxu0 0.0
    %821 = vmatprep.subr.mxu0 0.0
    %822 = vmatpush1.msra.mxu0 0.0
    %823 = vmatprep.subr.mxu0 0.0
    %824 = vmatpush1.msra.mxu0 0.0
    %825 = vmatprep.subr.mxu0 0.0
    %826 = vmatpush1.msra.mxu0 0.0
    %827 = vmatprep.subr.mxu0 0.0
    %828 = vmatpush1.msra.mxu0 0.0
    %829 = vmatprep.subr.mxu0 0.0
    %830 = vmatpush1.msra.mxu0 0.0
    %831 = vmatprep.subr.mxu0 0.0
    %832 = vmatpush1.msra.mxu0 0.0
    %833 = vmatprep.subr.mxu0 0.0
    %834 = vmatpush1.msra.mxu0 0.0
    %835 = vmatprep.subr.mxu0 0.0
    %836 = vmatpush1.msra.mxu0 0.0
    %837 = vmatprep.subr.mxu0 0.0
    %838 = vmatpush1.msra.mxu0 0.0
    %839 = vmatprep.subr.mxu0 0.0
    %840 = vmatpush1.msra.mxu0 0.0
    %841 = vmatprep.mubr.f32.mxu0 0.0
    %842 = vmatmul.mubr.f32.gmra.mrb[0].mxu0 %v775
    %v843 = vpop.f32.mrb[0].mxu0
    %v844 = vadd.f32 %v773, %v843
    %v845 = vpop.f32.mrb[0].mxu0
    %846 = vdwg.mxu0
    %vm847 = vcmask 64512
    %v848 = vsel %vm847, %v844, -inf
    %849 = vmax.xlane.f32.xlu0 %v848
    %v850 = vpop.xlane.xlu0 %849
    %v851 = vsub.f32 %v844, %v850
    %v852 = vmul.f32 %v851, 1.442695
    %v853 = vpow.pop %v852
    %v854 = vsel %vm847, %v853, 0.0
    %855 = vadd.xlane.f32.xlu0 %v854
    %v856 = vpop.xlane.xlu0 %855
    %v857 = vlog2.pop %v856
    %v858 = vmul.f32 %v857, 0.6931472
    %v859 = vsub.f32 %v851, %v858
    %860 = vst.msk [vmem:[#allocation2] sm:$0xff] %vm847, %v859
    // Predicated region
    $region10: #{tpu_custom_call.1} parent=1 // pred_check
      _
    $region11: #{tpu_custom_call.1} parent=1 // pred_check_branch
      %862 = sbr.rel (0) target = $region13
    $region12: #{tpu_custom_call.1} parent=1 // pred_region
      %s864 = ssub.s32 128, 128
      %865 = vsyncadd [#allocation3], %s864
      %s867 = sshll.u32 [#allocation2], 4
      %s868 = int_to_ptr.vmem [resolvable:$true] %s867
      %870 = dma.vmem_to_hbm [thread:$0]  %s868, 128, %s2, [#allocation3]
    $region13: #{tpu_custom_call.1} parent=1 // pred_fallthru
      _
    // Predicated region
    $region14: #{tpu_custom_call.1} parent=1 // pred_check
      _
    $region15: #{tpu_custom_call.1} parent=1 // pred_check_branch
      %872 = sbr.rel (0) target = $region17
    $region16: #{tpu_custom_call.1} parent=1 // pred_region
      %873 = dma.done [#allocation3], 128
    $region17: #{tpu_custom_call.1} parent=1 // pred_fallthru
      _
    %874 = vsyncpa [#allocation3], 1

</llo_original>
